<compile_context>
chip_gen: v6e
topology: v6e:2x2x1
jax: 0.10.0
libtpu: 0.0.40
codegen_flags: <defaults>
</compile_context>

<pallas_src>
import functools
import math

import jax
import jax.numpy as jnp
from jax.experimental import pallas as pl
from jax.experimental.pallas import tpu as pltpu

_LANE = 128


def _round_up(a, b):
    return (a + b - 1) // b * b


def _gelu(x, use_tanh):
    if use_tanh:
        # Opt-in tanh approximation (EUP path; numerically != PyTorch default).
        return jax.nn.gelu(x, approximate=True)
    # PyTorch F.gelu default (approximate='none') -> erf-based exact GELU.
    return 0.5 * x * (1.0 + jax.lax.erf(x * (1.0 / math.sqrt(2.0))))


def memory_mlp_kernel(x_ref, *refs, use_tanh_gelu=False):
    """Fused MLP: all layers applied to one row-tile of x kept in VMEM/vregs.

    refs = (w0_ref, w1_ref, ..., w_{depth-1}_ref, o_ref)
    """
    w_refs = refs[:-1]
    o_ref = refs[-1]

    h = x_ref[...]                       # native dtype -> native MXU path
    for ind, w_ref in enumerate(w_refs):
        if ind != 0:
            # Activation in f32 for accuracy, then back to weight dtype for the MXU.
            h = _gelu(h.astype(jnp.float32), use_tanh_gelu).astype(w_ref.dtype)
        h = jnp.dot(h, w_ref[...], preferred_element_type=jnp.float32)
    o_ref[...] = h.astype(o_ref.dtype)


def _cap_row_tile(tm, sub, d_in_p, d_out_p, w_shapes, x_itemsize, w_itemsize,
                  vmem_limit_bytes):
    """Shrink the row tile until the (rough) VMEM budget fits."""
    budget = int(vmem_limit_bytes * 0.75)
    w_bytes = sum(a * b for a, b in w_shapes) * w_itemsize * 2   # double-buffered
    max_feat = max([d_in_p, d_out_p] + [b for _, b in w_shapes])
    while tm > sub:
        io_bytes = 2 * tm * (d_in_p + d_out_p) * x_itemsize      # double-buffered x/o
        interm_bytes = 2 * tm * max_feat * 4                     # f32 intermediates
        if w_bytes + io_bytes + interm_bytes <= budget:
            break
        tm //= 2
    return max(sub, (tm // sub) * sub)


def memory_mlp(x, weights, *, tm=512, vmem_limit_bytes=48 * 1024 * 1024,
               use_tanh_gelu=False):
    """Apply MemoryMLP. x: (..., dim_in). weights: list of (dim_in_i, dim_out_i)."""
    orig_shape = x.shape
    dim_in = weights[0].shape[0]
    dim_out = weights[-1].shape[1]
    assert orig_shape[-1] == dim_in

    x2d = x.reshape(-1, dim_in)
    n_rows = x2d.shape[0]

    # Sublane granularity of the row tile (16 for 16-bit dtypes, 8 for f32).
    sub = 16 if jnp.dtype(x.dtype).itemsize == 2 else 8

    # --- Pad every feature dim to a lane multiple (exact: zero padding). ---
    p_in = [_round_up(w.shape[0], _LANE) for w in weights]
    p_out = [_round_up(w.shape[1], _LANE) for w in weights]
    padded_ws = []
    for w, pi, po in zip(weights, p_in, p_out):
        padded_ws.append(jnp.pad(w, ((0, pi - w.shape[0]), (0, po - w.shape[1]))))
    d_in_p, d_out_p = p_in[0], p_out[-1]

    # --- Choose the row tile: big, VMEM-budgeted, but no bigger than the input. ---
    tm_eff = max(sub, _round_up(min(tm, _round_up(n_rows, sub)), sub))
    tm_eff = _cap_row_tile(
        tm_eff, sub, d_in_p, d_out_p,
        [w.shape for w in padded_ws],
        jnp.dtype(x.dtype).itemsize, jnp.dtype(weights[0].dtype).itemsize,
        vmem_limit_bytes)

    rows_p = _round_up(n_rows, tm_eff)
    x_p = jnp.pad(x2d, ((0, rows_p - n_rows), (0, d_in_p - dim_in)))

    in_specs = [pl.BlockSpec((tm_eff, d_in_p), lambda i: (i, 0))]
    for w in padded_ws:
        # Full weight as one block, constant index -> VMEM resident across the grid.
        in_specs.append(pl.BlockSpec(w.shape, lambda i: (0, 0)))
    out_spec = pl.BlockSpec((tm_eff, d_out_p), lambda i: (i, 0))

    kernel = functools.partial(memory_mlp_kernel, use_tanh_gelu=use_tanh_gelu)

    out2d = pl.pallas_call(
        kernel,
        out_shape=jax.ShapeDtypeStruct((rows_p, d_out_p), x.dtype),
        grid_spec=pltpu.PrefetchScalarGridSpec(
            num_scalar_prefetch=0,
            grid=(rows_p // tm_eff,),
            in_specs=in_specs,
            out_specs=out_spec,
        ),
        compiler_params=pltpu.CompilerParams(
            dimension_semantics=("parallel",),
            vmem_limit_bytes=vmem_limit_bytes),
    )(x_p, *padded_ws)

    out2d = out2d[:n_rows, :dim_out]
    return out2d.reshape(*orig_shape[:-1], dim_out)


def init_memory_mlp_weights(key, dim, depth, expansion_factor=2.0,
                            dtype=jnp.float32):
    """Deterministic xavier_uniform init, same shapes as the PyTorch module."""
    dim_hidden = int(dim * expansion_factor)
    dims = (dim, *((dim_hidden,) * (depth - 1)), dim)
    weights = []
    for dim_i, dim_o in zip(dims[:-1], dims[1:]):
        key, sub = jax.random.split(key)
        bound = math.sqrt(6.0 / (dim_i + dim_o))
        w = jax.random.uniform(sub, (dim_i, dim_o), dtype=jnp.float32,
                               minval=-bound, maxval=bound).astype(dtype)
        weights.append(w)
    return weights


def memory_mlp_reference(x, weights):
    """Pure-JAX reference for correctness checking."""
    h = x
    for ind, w in enumerate(weights):
        if ind != 0:
            h = _gelu(h, use_tanh=False)
        h = h @ w
    return h


if __name__ == "__main__":
    key = jax.random.PRNGKey(0)

    # Small case matching the module defaults (dim=32, depth=3, expansion=2).
    dim, depth, expansion = 32, 3, 2.0
    batch, seq = 2, 8
    wkey, xkey = jax.random.split(key)
    weights = init_memory_mlp_weights(wkey, dim, depth, expansion)
    x = jax.random.normal(xkey, (batch, seq, dim), dtype=jnp.float32)

    out = jax.block_until_ready(memory_mlp(x, weights))
    ref = memory_mlp_reference(x, weights)
    assert out.shape == (batch, seq, dim)
    assert jnp.allclose(out, ref, atol=1e-5, rtol=1e-5), "mismatch vs reference (small)"

    # A lane-aligned case exercising a multi-step parallel grid and larger tiles.
    dim2, depth2 = 128, 2
    w2 = init_memory_mlp_weights(jax.random.PRNGKey(1), dim2, depth2, 2.0)
    x2 = jax.random.normal(jax.random.PRNGKey(2), (2, 512, dim2), dtype=jnp.float32)
    out2 = jax.block_until_ready(memory_mlp(x2, w2, tm=512))
    ref2 = memory_mlp_reference(x2, w2)
    assert out2.shape == (2, 512, dim2)
    assert jnp.allclose(out2, ref2, atol=1e-3, rtol=1e-3), "mismatch vs reference (large)"

    print("KERNEL_OK")
</pallas_src>

<mosaic_0001>
module attributes {stable_mosaic.version = 11 : i64} {
  func.func @memory_mlp_kernel(%arg0: i32, %arg1: memref<16x128xf32, #tpu.memory_space<vmem>>, %arg2: memref<128x128xf32, #tpu.memory_space<vmem>>, %arg3: memref<128x128xf32, #tpu.memory_space<vmem>>, %arg4: memref<128x128xf32, #tpu.memory_space<vmem>>, %arg5: memref<16x128xf32, #tpu.memory_space<vmem>>) attributes {dimension_semantics = [#tpu.dimension_semantics<parallel>], iteration_bounds = array<i64: 1>, scalar_prefetch = 0 : i64, scratch_operands = 0 : i64, tpu.core_type = #tpu.core_type<tc>, window_params = [{transform_indices = @transform_0, window_bounds = array<i64: 16, 128>}, {pipeline_mode = #tpu.pipeline_mode<synchronous>, transform_indices = @transform_1, window_bounds = array<i64: 128, 128>}, {pipeline_mode = #tpu.pipeline_mode<synchronous>, transform_indices = @transform_2, window_bounds = array<i64: 128, 128>}, {pipeline_mode = #tpu.pipeline_mode<synchronous>, transform_indices = @transform_3, window_bounds = array<i64: 128, 128>}, {transform_indices = @transform_4, window_bounds = array<i64: 16, 128>}]} {
    %c0 = arith.constant 0 : index
    %c0_0 = arith.constant 0 : index
    %0 = vector.load %arg1[%c0, %c0_0] : memref<16x128xf32, #tpu.memory_space<vmem>>, vector<16x128xf32>
    %c0_1 = arith.constant 0 : index
    %c0_2 = arith.constant 0 : index
    %1 = vector.load %arg2[%c0_1, %c0_2] : memref<128x128xf32, #tpu.memory_space<vmem>>, vector<128x128xf32>
    %cst = arith.constant dense<0.000000e+00> : vector<16x128xf32>
    %2 = tpu.matmul %0, %1, %cst {dimension_numbers = #tpu.dot_dimension_numbers<[1], [0], [0], [1], [0, 0, 1, 1], [], []>} : vector<16x128xf32>, vector<128x128xf32>, vector<16x128xf32> -> vector<16x128xf32>
    %cst_3 = arith.constant 5.000000e-01 : f32
    %3 = vector.broadcast %cst_3 : f32 to vector<16x128xf32>
    %4 = arith.mulf %3, %2 : vector<16x128xf32>
    %cst_4 = arith.constant 0.707106769 : f32
    %5 = vector.broadcast %cst_4 : f32 to vector<16x128xf32>
    %6 = arith.mulf %2, %5 : vector<16x128xf32>
    %7 = math.erf %6 : vector<16x128xf32>
    %cst_5 = arith.constant 1.000000e+00 : f32
    %8 = vector.broadcast %cst_5 : f32 to vector<16x128xf32>
    %9 = arith.addf %8, %7 : vector<16x128xf32>
    %10 = arith.mulf %4, %9 : vector<16x128xf32>
    %c0_6 = arith.constant 0 : index
    %c0_7 = arith.constant 0 : index
    %11 = vector.load %arg3[%c0_6, %c0_7] : memref<128x128xf32, #tpu.memory_space<vmem>>, vector<128x128xf32>
    %cst_8 = arith.constant dense<0.000000e+00> : vector<16x128xf32>
    %12 = tpu.matmul %10, %11, %cst_8 {dimension_numbers = #tpu.dot_dimension_numbers<[1], [0], [0], [1], [0, 0, 1, 1], [], []>} : vector<16x128xf32>, vector<128x128xf32>, vector<16x128xf32> -> vector<16x128xf32>
    %cst_9 = arith.constant 5.000000e-01 : f32
    %13 = vector.broadcast %cst_9 : f32 to vector<16x128xf32>
    %14 = arith.mulf %13, %12 : vector<16x128xf32>
    %cst_10 = arith.constant 0.707106769 : f32
    %15 = vector.broadcast %cst_10 : f32 to vector<16x128xf32>
    %16 = arith.mulf %12, %15 : vector<16x128xf32>
    %17 = math.erf %16 : vector<16x128xf32>
    %cst_11 = arith.constant 1.000000e+00 : f32
    %18 = vector.broadcast %cst_11 : f32 to vector<16x128xf32>
    %19 = arith.addf %18, %17 : vector<16x128xf32>
    %20 = arith.mulf %14, %19 : vector<16x128xf32>
    %c0_12 = arith.constant 0 : index
    %c0_13 = arith.constant 0 : index
    %21 = vector.load %arg4[%c0_12, %c0_13] : memref<128x128xf32, #tpu.memory_space<vmem>>, vector<128x128xf32>
    %cst_14 = arith.constant dense<0.000000e+00> : vector<16x128xf32>
    %22 = tpu.matmul %20, %21, %cst_14 {dimension_numbers = #tpu.dot_dimension_numbers<[1], [0], [0], [1], [0, 0, 1, 1], [], []>} : vector<16x128xf32>, vector<128x128xf32>, vector<16x128xf32> -> vector<16x128xf32>
    %c0_15 = arith.constant 0 : index
    %c0_16 = arith.constant 0 : index
    %23 = vector.load %arg5[%c0_15, %c0_16] : memref<16x128xf32, #tpu.memory_space<vmem>>, vector<16x128xf32>
    tpu.vector_store %arg5[%c0_15, %c0_16], %22 {strides = array<i32>} : memref<16x128xf32, #tpu.memory_space<vmem>>, vector<16x128xf32>,
    return
  }
  func.func @transform_0(%arg0: i32) -> (i32, i32) {
    %c0_i32 = arith.constant 0 : i32
    %c0_i32_0 = arith.constant 0 : i32
    return %arg0, %c0_i32 : i32, i32
  }
  func.func @transform_1(%arg0: i32) -> (i32, i32) {
    %c0_i32 = arith.constant 0 : i32
    %c0_i32_0 = arith.constant 0 : i32
    %c0_i32_1 = arith.constant 0 : i32
    return %c0_i32, %c0_i32_0 : i32, i32
  }
  func.func @transform_2(%arg0: i32) -> (i32, i32) {
    %c0_i32 = arith.constant 0 : i32
    %c0_i32_0 = arith.constant 0 : i32
    %c0_i32_1 = arith.constant 0 : i32
    return %c0_i32, %c0_i32_0 : i32, i32
  }
  func.func @transform_3(%arg0: i32) -> (i32, i32) {
    %c0_i32 = arith.constant 0 : i32
    %c0_i32_0 = arith.constant 0 : i32
    %c0_i32_1 = arith.constant 0 : i32
    return %c0_i32, %c0_i32_0 : i32, i32
  }
  func.func @transform_4(%arg0: i32) -> (i32, i32) {
    %c0_i32 = arith.constant 0 : i32
    %c0_i32_0 = arith.constant 0 : i32
    return %arg0, %c0_i32 : i32, i32
  }
}

</mosaic_0001>

<llo_original>
// kernel: tpu_custom_call.1
$region0: #{tpu_custom_call.1}
  #allocation0 [shape = 'u32[]', space=smem, size = 0x4, offset = 0x4, fixed_abs, tag = 'smem constant byte address 0x4 - core index']
  #allocation1 [shape = 'u32[144,128]{1,0:T(1,128)}', space=vmem, size = 0x12000, scoped, tag = 'internal scratch']
  %s0 = inlined_call_operand.hbm [shape: f32[16,128], index: 0, kind: input, shape index: {}]
  %s1 = inlined_call_operand.hbm [shape: f32[128,128], index: 1, kind: input, shape index: {}]
  %s2 = inlined_call_operand.hbm [shape: f32[128,128], index: 2, kind: input, shape index: {}]
  %s3 = inlined_call_operand.hbm [shape: f32[128,128], index: 3, kind: input, shape index: {}]
  %s4 = inlined_call_operand.hbm [shape: f32[16,128], index: 4, kind: output, shape index: {}]
  %s5 = sld [smem:[#allocation0]]
  $region42: #{tpu_custom_call.1} parent=0
    _
  %s7 = ssub.s32 1, %s5
  %s8 = scalar_select 0, %s7, %s5
  $region1: #{tpu_custom_call.1} parent=0
    #allocation2 [shape = 'u8[8192]{0}', space=vmem, size = 0x2000, scoped, tag = 'input window, operand 0, single buffered']
    #allocation3 [shape = 's32[1]{0}', space=sflag, size = 0x4, scoped, tag = 'scoped memory for tpu_custom_call.1']
    #allocation4 [shape = 's32[1]{0}', space=sflag, size = 0x4, scoped, tag = 'scoped memory for tpu_custom_call.1']
    #allocation5 [shape = 'u8[65536]{0}', space=vmem, size = 0x10000, scoped, tag = 'input window, operand 1, single buffered']
    #allocation6 [shape = 's32[1]{0}', space=sflag, size = 0x4, scoped, tag = 'scoped memory for tpu_custom_call.1']
    #allocation7 [shape = 'u8[65536]{0}', space=vmem, size = 0x10000, scoped, tag = 'input window, operand 2, single buffered']
    #allocation8 [shape = 'u8[65536]{0}', space=vmem, size = 0x10000, scoped, tag = 'input window, operand 3, single buffered']
    #allocation9 [shape = 's32[1]{0}', space=sflag, size = 0x4, scoped, tag = 'scoped memory for tpu_custom_call.1']
    #allocation10 [shape = 'u8[8192]{0}', space=vmem, size = 0x2000, scoped, tag = 'output window, operand 0, single buffered']
    %9 = vsyncpa [#allocation3], 0
    %10 = vsyncpa [#allocation6], 0
    %11 = vsyncpa [#allocation9], 0
    %12 = vsyncpa [#allocation4], 0
    // Predicated region
    $region2: #{tpu_custom_call.1} parent=1 // pred_check
      _
    $region3: #{tpu_custom_call.1} parent=1 // pred_check_branch
      %14 = sbr.rel (0) target = $region5
    $region4: #{tpu_custom_call.1} parent=1 // pred_region
      %s16 = ssub.s32 256, 256
      %17 = vsyncadd [#allocation3], %s16
      %s18 = sshll.u32 [#allocation2], 4
      %s19 = int_to_ptr.vmem [resolvable:$true] %s18
      %24 = dma.hbm_to_vmem [thread:$0]  %s0, 256, %s19, [#allocation3], 128, 128, 8
    $region5: #{tpu_custom_call.1} parent=1 // pred_fallthru
      _
    // Predicated region
    $region6: #{tpu_custom_call.1} parent=1 // pred_check
      _
    $region7: #{tpu_custom_call.1} parent=1 // pred_check_branch
      %26 = sbr.rel (0) target = $region9
    $region8: #{tpu_custom_call.1} parent=1 // pred_region
      %s28 = ssub.s32 2048, 2048
      %29 = vsyncadd [#allocation6], %s28
      %s30 = sshll.u32 [#allocation5], 4
      %s31 = int_to_ptr.vmem [resolvable:$true] %s30
      %36 = dma.hbm_to_vmem [thread:$0]  %s1, 2048, %s31, [#allocation6], 128, 128, 8
    $region9: #{tpu_custom_call.1} parent=1 // pred_fallthru
      _
    // Predicated region
    $region10: #{tpu_custom_call.1} parent=1 // pred_check
      _
    $region11: #{tpu_custom_call.1} parent=1 // pred_check_branch
      %38 = sbr.rel (0) target = $region13
    $region12: #{tpu_custom_call.1} parent=1 // pred_region
      %s40 = ssub.s32 2048, 2048
      %41 = vsyncadd [#allocation6], %s40
      %s42 = sshll.u32 [#allocation7], 4
      %s43 = int_to_ptr.vmem [resolvable:$true] %s42
      %48 = dma.hbm_to_vmem [thread:$0]  %s2, 2048, %s43, [#allocation6], 128, 128, 8
    $region13: #{tpu_custom_call.1} parent=1 // pred_fallthru
      _
    // Predicated region
    $region14: #{tpu_custom_call.1} parent=1 // pred_check
      _
    $region15: #{tpu_custom_call.1} parent=1 // pred_check_branch
      %50 = sbr.rel (0) target = $region17
    $region16: #{tpu_custom_call.1} parent=1 // pred_region
      %s52 = ssub.s32 2048, 2048
      %53 = vsyncadd [#allocation9], %s52
      %s54 = sshll.u32 [#allocation8], 4
      %s55 = int_to_ptr.vmem [resolvable:$true] %s54
      %60 = dma.hbm_to_vmem [thread:$0]  %s3, 2048, %s55, [#allocation9], 128, 128, 8
    $region17: #{tpu_custom_call.1} parent=1 // pred_fallthru
      _
    // Predicated region
    $region18: #{tpu_custom_call.1} parent=1 // pred_check
      _
    $region19: #{tpu_custom_call.1} parent=1 // pred_check_branch
      %62 = sbr.rel (0) target = $region21
    $region20: #{tpu_custom_call.1} parent=1 // pred_region
      %63 = dma.done [#allocation3], 256
    $region21: #{tpu_custom_call.1} parent=1 // pred_fallthru
      _
    // Predicated region
    $region22: #{tpu_custom_call.1} parent=1 // pred_check
      _
    $region23: #{tpu_custom_call.1} parent=1 // pred_check_branch
      %65 = sbr.rel (0) target = $region25
    $region24: #{tpu_custom_call.1} parent=1 // pred_region
      %66 = dma.done [#allocation6], 2048
    $region25: #{tpu_custom_call.1} parent=1 // pred_fallthru
      _
    // Predicated region
    $region26: #{tpu_custom_call.1} parent=1 // pred_check
      _
    $region27: #{tpu_custom_call.1} parent=1 // pred_check_branch
      %68 = sbr.rel (0) target = $region29
    $region28: #{tpu_custom_call.1} parent=1 // pred_region
      %69 = dma.done [#allocation6], 2048
    $region29: #{tpu_custom_call.1} parent=1 // pred_fallthru
      _
    // Predicated region
    $region30: #{tpu_custom_call.1} parent=1 // pred_check
      _
    $region31: #{tpu_custom_call.1} parent=1 // pred_check_branch
      %71 = sbr.rel (0) target = $region33
    $region32: #{tpu_custom_call.1} parent=1 // pred_region
      %72 = dma.done [#allocation9], 2048
    $region33: #{tpu_custom_call.1} parent=1 // pred_fallthru
      _
    %v73 = vld [vmem:[#allocation2] sm:$0xff]
    %v74 = vld [vmem:[#allocation2 + $0x8] sm:$0xff]
    %v75 = vld [vmem:[#allocation5] sm:$0xff]
    %v76 = vld [vmem:[#allocation5 + $0x8] sm:$0xff]
    %v77 = vld [vmem:[#allocation5 + $0x10] sm:$0xff]
    %v78 = vld [vmem:[#allocation5 + $0x18] sm:$0xff]
    %v79 = vld [vmem:[#allocation5 + $0x20] sm:$0xff]
    %v80 = vld [vmem:[#allocation5 + $0x28] sm:$0xff]
    %v81 = vld [vmem:[#allocation5 + $0x30] sm:$0xff]
    %v82 = vld [vmem:[#allocation5 + $0x38] sm:$0xff]
    %v83 = vld [vmem:[#allocation5 + $0x40] sm:$0xff]
    %v84 = vld [vmem:[#allocation5 + $0x48] sm:$0xff]
    %v85 = vld [vmem:[#allocation5 + $0x50] sm:$0xff]
    %v86 = vld [vmem:[#allocation5 + $0x58] sm:$0xff]
    %v87 = vld [vmem:[#allocation5 + $0x60] sm:$0xff]
    %v88 = vld [vmem:[#allocation5 + $0x68] sm:$0xff]
    %v89 = vld [vmem:[#allocation5 + $0x70] sm:$0xff]
    %v90 = vld [vmem:[#allocation5 + $0x78] sm:$0xff]
    %91 = vmatprep.subr.mxu0 0.0
    %92 = vmatpush1.msra.mxu0 %v90
    %93 = vmatprep.subr.mxu0 0.0
    %94 = vmatpush1.msra.mxu0 %v89
    %95 = vmatprep.subr.mxu0 0.0
    %96 = vmatpush1.msra.mxu0 %v88
    %97 = vmatprep.subr.mxu0 0.0
    %98 = vmatpush1.msra.mxu0 %v87
    %99 = vmatprep.subr.mxu0 0.0
    %100 = vmatpush1.msra.mxu0 %v86
    %101 = vmatprep.subr.mxu0 0.0
    %102 = vmatpush1.msra.mxu0 %v85
    %103 = vmatprep.subr.mxu0 0.0
    %104 = vmatpush1.msra.mxu0 %v84
    %105 = vmatprep.subr.mxu0 0.0
    %106 = vmatpush1.msra.mxu0 %v83
    %107 = vmatprep.subr.mxu0 0.0
    %108 = vmatpush1.msra.mxu0 %v82
    %109 = vmatprep.subr.mxu0 0.0
    %110 = vmatpush1.msra.mxu0 %v81
    %111 = vmatprep.subr.mxu0 0.0
    %112 = vmatpush1.msra.mxu0 %v80
    %113 = vmatprep.subr.mxu0 0.0
    %114 = vmatpush1.msra.mxu0 %v79
    %115 = vmatprep.subr.mxu0 0.0
    %116 = vmatpush1.msra.mxu0 %v78
    %117 = vmatprep.subr.mxu0 0.0
    %118 = vmatpush1.msra.mxu0 %v77
    %119 = vmatprep.subr.mxu0 0.0
    %120 = vmatpush1.msra.mxu0 %v76
    %121 = vmatprep.subr.mxu0 0.0
    %122 = vmatpush1.msra.mxu0 %v75
    %123 = vmatprep.subr.mxu0 0.0
    %124 = vmatpush2.msra.mxu0 0.0
    %125 = vmatprep.subr.mxu0 0.0
    %126 = vmatpush2.msra.mxu0 0.0
    %127 = vmatprep.subr.mxu0 0.0
    %128 = vmatpush2.msra.mxu0 0.0
    %129 = vmatprep.subr.mxu0 0.0
    %130 = vmatpush2.msra.mxu0 0.0
    %131 = vmatprep.subr.mxu0 0.0
    %132 = vmatpush2.msra.mxu0 0.0
    %133 = vmatprep.subr.mxu0 0.0
    %134 = vmatpush2.msra.mxu0 0.0
    %135 = vmatprep.subr.mxu0 0.0
    %136 = vmatpush2.msra.mxu0 0.0
    %137 = vmatprep.subr.mxu0 0.0
    %138 = vmatpush2.msra.mxu0 0.0
    %139 = vmatprep.subr.mxu0 0.0
    %140 = vmatpush2.msra.mxu0 0.0
    %141 = vmatprep.subr.mxu0 0.0
    %142 = vmatpush2.msra.mxu0 0.0
    %143 = vmatprep.subr.mxu0 0.0
    %144 = vmatpush2.msra.mxu0 0.0
    %145 = vmatprep.subr.mxu0 0.0
    %146 = vmatpush2.msra.mxu0 0.0
    %147 = vmatprep.subr.mxu0 0.0
    %148 = vmatpush2.msra.mxu0 0.0
    %149 = vmatprep.subr.mxu0 0.0
    %150 = vmatpush2.msra.mxu0 0.0
    %151 = vmatprep.subr.mxu0 0.0
    %152 = vmatpush2.msra.mxu0 0.0
    %153 = vmatprep.subr.mxu0 0.0
    %154 = vmatpush2.msra.mxu0 0.0
    %155 = vmatprep.mubr.f32.mxu0 0.0
    %156 = vmatmul.mubr.f32.gmra.mxu0 %v73
    %v157 = vpop.f32.mrf.mxu0
    %v158 = vadd.f32 0.0, %v157
    %v159 = vpop.f32.mrf.mxu0
    %160 = vmatprep.mubr.f32.mxu0 0.0
    %161 = vmatmul.mubr.f32.gmra.mxu0 %v74
    %v162 = vpop.f32.mrf.mxu0
    %v163 = vadd.f32 0.0, %v162
    %v164 = vpop.f32.mrf.mxu0
    %165 = vdwg.mxu0
    %v166 = vmul.f32 %v158, 0.5
    %v167 = vmul.f32 %v163, 0.5
    %v168 = vmul.f32 %v158, 0.70710677
    %v169 = vmul.f32 %v163, 0.70710677
    %v170 = verf.f32.pop %v168
    %v171 = verf.f32.pop %v169
    %v172 = vadd.f32 %v170, 1.0
    %v173 = vadd.f32 %v171, 1.0
    %v174 = vmul.f32 %v166, %v172
    %v175 = vmul.f32 %v167, %v173
    %v176 = vld [vmem:[#allocation7] sm:$0xff]
    %v177 = vld [vmem:[#allocation7 + $0x8] sm:$0xff]
    %v178 = vld [vmem:[#allocation7 + $0x10] sm:$0xff]
    %v179 = vld [vmem:[#allocation7 + $0x18] sm:$0xff]
    %v180 = vld [vmem:[#allocation7 + $0x20] sm:$0xff]
    %v181 = vld [vmem:[#allocation7 + $0x28] sm:$0xff]
    %v182 = vld [vmem:[#allocation7 + $0x30] sm:$0xff]
    %v183 = vld [vmem:[#allocation7 + $0x38] sm:$0xff]
    %v184 = vld [vmem:[#allocation7 + $0x40] sm:$0xff]
    %v185 = vld [vmem:[#allocation7 + $0x48] sm:$0xff]
    %v186 = vld [vmem:[#allocation7 + $0x50] sm:$0xff]
    %v187 = vld [vmem:[#allocation7 + $0x58] sm:$0xff]
    %v188 = vld [vmem:[#allocation7 + $0x60] sm:$0xff]
    %v189 = vld [vmem:[#allocation7 + $0x68] sm:$0xff]
    %v190 = vld [vmem:[#allocation7 + $0x70] sm:$0xff]
    %v191 = vld [vmem:[#allocation7 + $0x78] sm:$0xff]
    %192 = vmatprep.subr.mxu0 0.0
    %193 = vmatpush1.msra.mxu0 %v191
    %194 = vmatprep.subr.mxu0 0.0
    %195 = vmatpush1.msra.mxu0 %v190
    %196 = vmatprep.subr.mxu0 0.0
    %197 = vmatpush1.msra.mxu0 %v189
    %198 = vmatprep.subr.mxu0 0.0
    %199 = vmatpush1.msra.mxu0 %v188
    %200 = vmatprep.subr.mxu0 0.0
    %201 = vmatpush1.msra.mxu0 %v187
    %202 = vmatprep.subr.mxu0 0.0
    %203 = vmatpush1.msra.mxu0 %v186
    %204 = vmatprep.subr.mxu0 0.0
    %205 = vmatpush1.msra.mxu0 %v185
    %206 = vmatprep.subr.mxu0 0.0
    %207 = vmatpush1.msra.mxu0 %v184
    %208 = vmatprep.subr.mxu0 0.0
    %209 = vmatpush1.msra.mxu0 %v183
    %210 = vmatprep.subr.mxu0 0.0
    %211 = vmatpush1.msra.mxu0 %v182
    %212 = vmatprep.subr.mxu0 0.0
    %213 = vmatpush1.msra.mxu0 %v181
    %214 = vmatprep.subr.mxu0 0.0
    %215 = vmatpush1.msra.mxu0 %v180
    %216 = vmatprep.subr.mxu0 0.0
    %217 = vmatpush1.msra.mxu0 %v179
    %218 = vmatprep.subr.mxu0 0.0
    %219 = vmatpush1.msra.mxu0 %v178
    %220 = vmatprep.subr.mxu0 0.0
    %221 = vmatpush1.msra.mxu0 %v177
    %222 = vmatprep.subr.mxu0 0.0
    %223 = vmatpush1.msra.mxu0 %v176
    %224 = vmatprep.subr.mxu0 0.0
    %225 = vmatpush2.msra.mxu0 0.0
    %226 = vmatprep.subr.mxu0 0.0
    %227 = vmatpush2.msra.mxu0 0.0
    %228 = vmatprep.subr.mxu0 0.0
    %229 = vmatpush2.msra.mxu0 0.0
    %230 = vmatprep.subr.mxu0 0.0
    %231 = vmatpush2.msra.mxu0 0.0
    %232 = vmatprep.subr.mxu0 0.0
    %233 = vmatpush2.msra.mxu0 0.0
    %234 = vmatprep.subr.mxu0 0.0
    %235 = vmatpush2.msra.mxu0 0.0
    %236 = vmatprep.subr.mxu0 0.0
    %237 = vmatpush2.msra.mxu0 0.0
    %238 = vmatprep.subr.mxu0 0.0
    %239 = vmatpush2.msra.mxu0 0.0
    %240 = vmatprep.subr.mxu0 0.0
    %241 = vmatpush2.msra.mxu0 0.0
    %242 = vmatprep.subr.mxu0 0.0
    %243 = vmatpush2.msra.mxu0 0.0
    %244 = vmatprep.subr.mxu0 0.0
    %245 = vmatpush2.msra.mxu0 0.0
    %246 = vmatprep.subr.mxu0 0.0
    %247 = vmatpush2.msra.mxu0 0.0
    %248 = vmatprep.subr.mxu0 0.0
    %249 = vmatpush2.msra.mxu0 0.0
    %250 = vmatprep.subr.mxu0 0.0
    %251 = vmatpush2.msra.mxu0 0.0
    %252 = vmatprep.subr.mxu0 0.0
    %253 = vmatpush2.msra.mxu0 0.0
    %254 = vmatprep.subr.mxu0 0.0
    %255 = vmatpush2.msra.mxu0 0.0
    %256 = vmatprep.mubr.f32.mxu0 0.0
    %257 = vmatmul.mubr.f32.gmra.mxu0 %v174
    %v258 = vpop.f32.mrf.mxu0
    %v259 = vadd.f32 0.0, %v258
    %v260 = vpop.f32.mrf.mxu0
    %261 = vmatprep.mubr.f32.mxu0 0.0
    %262 = vmatmul.mubr.f32.gmra.mxu0 %v175
    %v263 = vpop.f32.mrf.mxu0
    %v264 = vadd.f32 0.0, %v263
    %v265 = vpop.f32.mrf.mxu0
    %266 = vdwg.mxu0
    %v267 = vmul.f32 %v259, 0.5
    %v268 = vmul.f32 %v264, 0.5
    %v269 = vmul.f32 %v259, 0.70710677
    %v270 = vmul.f32 %v264, 0.70710677
    %v271 = verf.f32.pop %v269
    %v272 = verf.f32.pop %v270
    %v273 = vadd.f32 %v271, 1.0
    %v274 = vadd.f32 %v272, 1.0
    %v275 = vmul.f32 %v267, %v273
    %v276 = vmul.f32 %v268, %v274
    %v277 = vld [vmem:[#allocation8] sm:$0xff]
    %v278 = vld [vmem:[#allocation8 + $0x8] sm:$0xff]
    %v279 = vld [vmem:[#allocation8 + $0x10] sm:$0xff]
    %v280 = vld [vmem:[#allocation8 + $0x18] sm:$0xff]
    %v281 = vld [vmem:[#allocation8 + $0x20] sm:$0xff]
    %v282 = vld [vmem:[#allocation8 + $0x28] sm:$0xff]
    %v283 = vld [vmem:[#allocation8 + $0x30] sm:$0xff]
    %v284 = vld [vmem:[#allocation8 + $0x38] sm:$0xff]
    %v285 = vld [vmem:[#allocation8 + $0x40] sm:$0xff]
    %v286 = vld [vmem:[#allocation8 + $0x48] sm:$0xff]
    %v287 = vld [vmem:[#allocation8 + $0x50] sm:$0xff]
    %v288 = vld [vmem:[#allocation8 + $0x58] sm:$0xff]
    %v289 = vld [vmem:[#allocation8 + $0x60] sm:$0xff]
    %v290 = vld [vmem:[#allocation8 + $0x68] sm:$0xff]
    %v291 = vld [vmem:[#allocation8 + $0x70] sm:$0xff]
    %v292 = vld [vmem:[#allocation8 + $0x78] sm:$0xff]
    %293 = vmatprep.subr.mxu0 0.0
    %294 = vmatpush1.msra.mxu0 %v292
    %295 = vmatprep.subr.mxu0 0.0
    %296 = vmatpush1.msra.mxu0 %v291
    %297 = vmatprep.subr.mxu0 0.0
    %298 = vmatpush1.msra.mxu0 %v290
    %299 = vmatprep.subr.mxu0 0.0
    %300 = vmatpush1.msra.mxu0 %v289
    %301 = vmatprep.subr.mxu0 0.0
    %302 = vmatpush1.msra.mxu0 %v288
    %303 = vmatprep.subr.mxu0 0.0
    %304 = vmatpush1.msra.mxu0 %v287
    %305 = vmatprep.subr.mxu0 0.0
    %306 = vmatpush1.msra.mxu0 %v286
    %307 = vmatprep.subr.mxu0 0.0
    %308 = vmatpush1.msra.mxu0 %v285
    %309 = vmatprep.subr.mxu0 0.0
    %310 = vmatpush1.msra.mxu0 %v284
    %311 = vmatprep.subr.mxu0 0.0
    %312 = vmatpush1.msra.mxu0 %v283
    %313 = vmatprep.subr.mxu0 0.0
    %314 = vmatpush1.msra.mxu0 %v282
    %315 = vmatprep.subr.mxu0 0.0
    %316 = vmatpush1.msra.mxu0 %v281
    %317 = vmatprep.subr.mxu0 0.0
    %318 = vmatpush1.msra.mxu0 %v280
    %319 = vmatprep.subr.mxu0 0.0
    %320 = vmatpush1.msra.mxu0 %v279
    %321 = vmatprep.subr.mxu0 0.0
    %322 = vmatpush1.msra.mxu0 %v278
    %323 = vmatprep.subr.mxu0 0.0
    %324 = vmatpush1.msra.mxu0 %v277
    %325 = vmatprep.subr.mxu0 0.0
    %326 = vmatpush2.msra.mxu0 0.0
    %327 = vmatprep.subr.mxu0 0.0
    %328 = vmatpush2.msra.mxu0 0.0
    %329 = vmatprep.subr.mxu0 0.0
    %330 = vmatpush2.msra.mxu0 0.0
    %331 = vmatprep.subr.mxu0 0.0
    %332 = vmatpush2.msra.mxu0 0.0
    %333 = vmatprep.subr.mxu0 0.0
    %334 = vmatpush2.msra.mxu0 0.0
    %335 = vmatprep.subr.mxu0 0.0
    %336 = vmatpush2.msra.mxu0 0.0
    %337 = vmatprep.subr.mxu0 0.0
    %338 = vmatpush2.msra.mxu0 0.0
    %339 = vmatprep.subr.mxu0 0.0
    %340 = vmatpush2.msra.mxu0 0.0
    %341 = vmatprep.subr.mxu0 0.0
    %342 = vmatpush2.msra.mxu0 0.0
    %343 = vmatprep.subr.mxu0 0.0
    %344 = vmatpush2.msra.mxu0 0.0
    %345 = vmatprep.subr.mxu0 0.0
    %346 = vmatpush2.msra.mxu0 0.0
    %347 = vmatprep.subr.mxu0 0.0
    %348 = vmatpush2.msra.mxu0 0.0
    %349 = vmatprep.subr.mxu0 0.0
    %350 = vmatpush2.msra.mxu0 0.0
    %351 = vmatprep.subr.mxu0 0.0
    %352 = vmatpush2.msra.mxu0 0.0
    %353 = vmatprep.subr.mxu0 0.0
    %354 = vmatpush2.msra.mxu0 0.0
    %355 = vmatprep.subr.mxu0 0.0
    %356 = vmatpush2.msra.mxu0 0.0
    %357 = vmatprep.mubr.f32.mxu0 0.0
    %358 = vmatmul.mubr.f32.gmra.mxu0 %v275
    %v359 = vpop.f32.mrf.mxu0
    %v360 = vadd.f32 0.0, %v359
    %v361 = vpop.f32.mrf.mxu0
    %362 = vmatprep.mubr.f32.mxu0 0.0
    %363 = vmatmul.mubr.f32.gmra.mxu0 %v276
    %v364 = vpop.f32.mrf.mxu0
    %v365 = vadd.f32 0.0, %v364
    %v366 = vpop.f32.mrf.mxu0
    %367 = vdwg.mxu0
    %368 = vst [vmem:[#allocation10] sm:$0xff] %v360
    %369 = vst [vmem:[#allocation10 + $0x8] sm:$0xff] %v365
    // Predicated region
    $region34: #{tpu_custom_call.1} parent=1 // pred_check
      _
    $region35: #{tpu_custom_call.1} parent=1 // pred_check_branch
      %371 = sbr.rel (0) target = $region37
    $region36: #{tpu_custom_call.1} parent=1 // pred_region
      %s373 = ssub.s32 256, 256
      %374 = vsyncadd [#allocation4], %s373
      %s375 = sshll.u32 [#allocation10], 4
      %s376 = int_to_ptr.vmem [resolvable:$true] %s375
      %381 = dma.vmem_to_hbm [thread:$0]  %s376, 256, %s4, [#allocation4], 128, 128, 8
    $region37: #{tpu_custom_call.1} parent=1 // pred_fallthru
      _
    // Predicated region
    $region38: #{tpu_custom_call.1} parent=1 // pred_check
      _
    $region39: #{tpu_custom_call.1} parent=1 // pred_check_branch
      %383 = sbr.rel (0) target = $region41
    $region40: #{tpu_custom_call.1} parent=1 // pred_region
      %384 = dma.done [#allocation4], 256
    $region41: #{tpu_custom_call.1} parent=1 // pred_fallthru
      _
    %385 = vsyncpa [#allocation3], 1
    %386 = vsyncpa [#allocation6], 1
    %387 = vsyncpa [#allocation9], 1
    %388 = vsyncpa [#allocation4], 1

</llo_original>
